<compile_context>
chip_gen: v7x
topology: tpu7x:2x2x1
jax: 0.10.0
libtpu: 0.0.40
codegen_flags: <defaults>
</compile_context>

<pallas_src>
import jax
import jax.numpy as jnp
from jax.experimental import pallas as pl
from jax.experimental.pallas import tpu as pltpu


def concat_kernel(a_ref, b_ref, o_ref):
    # torch.cat([a, b], dim=1): direct static sub-slice stores into the
    # (2, 8) output block.
    o_ref[:, 0:4] = a_ref[...]
    o_ref[:, 4:8] = b_ref[...]


def pallas_concat(a: jax.Array, b: jax.Array) -> jax.Array:
    """Concatenate two (2, 4) blocks along dim=1 -> (2, 8) inside Pallas."""
    return pl.pallas_call(
        concat_kernel,
        out_shape=jax.ShapeDtypeStruct((2, 8), jnp.float32),
        # No grid: one invocation, whole-array blocks resident in VMEM.
        in_specs=[
            pl.BlockSpec(memory_space=pltpu.MemorySpace.VMEM),
            pl.BlockSpec(memory_space=pltpu.MemorySpace.VMEM),
        ],
        out_specs=pl.BlockSpec(memory_space=pltpu.MemorySpace.VMEM),
    )(a, b)


def _model_forward(x, key):
    # Matches the PyTorch module: the input x is ignored; two fresh (2, 4)
    # standard-normal tensors are drawn and concatenated along dim=1 -> (2, 8).
    del x  # unused, same as the PyTorch forward
    k1, k2 = jax.random.split(key)
    a = jax.random.normal(k1, (2, 4), dtype=jnp.float32)
    b = jax.random.normal(k2, (2, 4), dtype=jnp.float32)
    return pallas_concat(a, b)


# jit once; key is a traced array argument so each distinct key gives fresh
# draws without re-tracing / re-lowering the pallas_call.
model_forward = jax.jit(_model_forward)


if __name__ == "__main__":
    # Example input mirroring `x = torch.randn(1, 2, 2)` (ignored by forward).
    x = jax.random.normal(jax.random.PRNGKey(0), (1, 2, 2), dtype=jnp.float32)

    key0 = jax.random.PRNGKey(0)
    key1 = jax.random.PRNGKey(1)

    out = jax.block_until_ready(model_forward(x, key0))

    # Shape / dtype / finiteness checks (values are random by construction,
    # so no bit-exact torch reference exists — same as torch.randn).
    assert out.shape == (2, 8), out.shape
    assert out.dtype == jnp.float32, out.dtype
    assert bool(jnp.all(jnp.isfinite(out))), "non-finite values in output"

    # Same key -> deterministic result.
    out_again = jax.block_until_ready(model_forward(x, key0))
    assert jnp.array_equal(out, out_again), "same-key outputs differ"

    # Different key -> fresh draws (per-call freshness, like torch.randn).
    out_other = jax.block_until_ready(model_forward(x, key1))
    assert not jnp.array_equal(out, out_other), "different keys gave identical output"

    # The two concatenated halves are distinct independent draws.
    assert not jnp.array_equal(out[:, :4], out[:, 4:]), "left/right halves identical"

    print("KERNEL_OK")
</pallas_src>

<mosaic_0001>
module attributes {stable_mosaic.version = 11 : i64} {
  func.func @concat_kernel(%arg0: memref<2x4xf32, #tpu.memory_space<vmem>>, %arg1: memref<2x4xf32, #tpu.memory_space<vmem>>, %arg2: memref<2x8xf32, #tpu.memory_space<vmem>>) attributes {dimension_semantics = [], scalar_prefetch = 0 : i64, scratch_operands = 0 : i64, tpu.core_type = #tpu.core_type<tc>} {
    %c0 = arith.constant 0 : index
    %c0_0 = arith.constant 0 : index
    %0 = vector.load %arg0[%c0, %c0_0] : memref<2x4xf32, #tpu.memory_space<vmem>>, vector<2x4xf32>
    %c0_1 = arith.constant 0 : index
    %c0_2 = arith.constant 0 : index
    %1 = vector.load %arg2[%c0_1, %c0_2] : memref<2x8xf32, #tpu.memory_space<vmem>>, vector<2x4xf32>
    tpu.vector_store %arg2[%c0_1, %c0_2], %0 {strides = array<i32>} : memref<2x8xf32, #tpu.memory_space<vmem>>, vector<2x4xf32>,
    %c0_3 = arith.constant 0 : index
    %c0_4 = arith.constant 0 : index
    %2 = vector.load %arg1[%c0_3, %c0_4] : memref<2x4xf32, #tpu.memory_space<vmem>>, vector<2x4xf32>
    %c0_5 = arith.constant 0 : index
    %c4 = arith.constant 4 : index
    %3 = vector.load %arg2[%c0_5, %c4] : memref<2x8xf32, #tpu.memory_space<vmem>>, vector<2x4xf32>
    tpu.vector_store %arg2[%c0_5, %c4], %2 {strides = array<i32>} : memref<2x8xf32, #tpu.memory_space<vmem>>, vector<2x4xf32>,
    return
  }
}

</mosaic_0001>

<llo_original>
// kernel: _model_forward.3
$region0: #{_model_forward.3}
  #allocation0 [shape = 'u32[]', space=smem, size = 0x4, offset = 0x4, fixed_abs, tag = 'smem constant byte address 0x4 - core index']
  #allocation1 [shape = 'u32[144,128]{1,0:T(1,128)}', space=vmem, size = 0x12000, scoped, tag = 'internal scratch']
  %s0 = inlined_call_operand.vmem [shape: f32[2,4], index: 0, kind: input, shape index: {}]
  %s1 = inlined_call_operand.vmem [shape: f32[2,4], index: 1, kind: input, shape index: {}]
  %s2 = inlined_call_operand.hbm [shape: f32[2,8], index: 2, kind: output, shape index: {}]
  %s3 = sld [smem:[#allocation0]]
  $region18: #{_model_forward.3} parent=0
    _
  %s5 = ssub.s32 1, %s3
  %s6 = scalar_select 0, %s5, %s3
  $region1: #{_model_forward.3} parent=0
    #allocation2 [shape = 'u8[1024]{0}', space=vmem, size = 0x400, scoped, tag = 'output window, operand 0, single buffered']
    #allocation3 [shape = 's32[1]{0}', space=sflag, size = 0x4, scoped, tag = 'scoped memory for _model_forward.3']
    %7 = vsyncpa [#allocation3], 0
    // Predicated region
    $region2: #{_model_forward.3} parent=1 // pred_check
      _
    $region3: #{_model_forward.3} parent=1 // pred_check_branch
      %9 = sbr.rel (0) target = $region5
    $region4: #{_model_forward.3} parent=1 // pred_region
      _
    $region5: #{_model_forward.3} parent=1 // pred_fallthru
      _
    // Predicated region
    $region6: #{_model_forward.3} parent=1 // pred_check
      _
    $region7: #{_model_forward.3} parent=1 // pred_check_branch
      %11 = sbr.rel (0) target = $region9
    $region8: #{_model_forward.3} parent=1 // pred_region
      _
    $region9: #{_model_forward.3} parent=1 // pred_fallthru
      _
    %v12 = vld [vmem:[%s0] sm:$0x3]
    %vm13 = vcmask 25600
    %14 = vst.msk [vmem:[#allocation2] sm:$0x3] %vm13, %v12
    %v15 = vld [vmem:[%s1] sm:$0x3]
    %17 = vrot.lane.b32.xlu0 %v15, 4
    %v18 = vpop.permute.xlu0 %17
    %vm20 = vcmask 58400
    %21 = vst.msk [vmem:[#allocation2] sm:$0x3] %vm20, %v18
    // Predicated region
    $region10: #{_model_forward.3} parent=1 // pred_check
      _
    $region11: #{_model_forward.3} parent=1 // pred_check_branch
      %23 = sbr.rel (0) target = $region13
    $region12: #{_model_forward.3} parent=1 // pred_region
      %s25 = ssub.s32 32, 32
      %26 = vsyncadd [#allocation3], %s25
      %s28 = sshll.u32 [#allocation2], 4
      %s29 = int_to_ptr.vmem [resolvable:$true] %s28
      %31 = dma.vmem_to_hbm [thread:$0]  %s29, 32, %s2, [#allocation3]
    $region13: #{_model_forward.3} parent=1 // pred_fallthru
      _
    // Predicated region
    $region14: #{_model_forward.3} parent=1 // pred_check
      _
    $region15: #{_model_forward.3} parent=1 // pred_check_branch
      %33 = sbr.rel (0) target = $region17
    $region16: #{_model_forward.3} parent=1 // pred_region
      %34 = dma.done [#allocation3], 32
    $region17: #{_model_forward.3} parent=1 // pred_fallthru
      _
    %35 = vsyncpa [#allocation3], 1

</llo_original>
